<compile_context>
chip_gen: v6e
topology: v6e:2x2x1
jax: 0.10.0
libtpu: 0.0.40
codegen_flags: <defaults>
</compile_context>

<pallas_src>
import functools

import jax
import jax.numpy as jnp
import numpy as np
from jax import lax
from jax.experimental import pallas as pl
from jax.experimental.pallas import tpu as pltpu


# ----------------------------------------------------------------------------
# Kernel 1: grad-norm reduction  sqrt(mean(x**2))   (lane-dense layout)
# ----------------------------------------------------------------------------
def _grad_norm_kernel(x_ref, gn_ref):
    x = x_ref[...]
    gn_ref[...] = jnp.sqrt(jnp.mean(x * x, axis=(0, 1), keepdims=True))


def _compute_grad_norm(x):
    """sqrt(mean(x**2)) as a (1,1) f32 array.  Computed once per rollout."""
    xf = x.astype(jnp.float32)
    total = xf.size
    if total % 128 == 0:
        x2d = xf.reshape(total // 128, 128)     # lane-dense reduction
    else:
        x2d = xf.reshape(1, total)
    return pl.pallas_call(
        _grad_norm_kernel,
        out_shape=jax.ShapeDtypeStruct((1, 1), jnp.float32),
        in_specs=[pl.BlockSpec(memory_space=pltpu.MemorySpace.VMEM)],
        out_specs=pl.BlockSpec(memory_space=pltpu.MemorySpace.VMEM),
    )(x2d)


# ----------------------------------------------------------------------------
# One-time weight repacking (hoisted out of the recurrent step)
# ----------------------------------------------------------------------------
def pack_params(params, dim_in, dim_hidden):
    """Repack conv weights into 2-D matmul tiles. Call ONCE per model."""
    Cin, Chid = dim_in, dim_hidden
    Ctot = Cin + Chid
    CB = ((Ctot + 7) // 8) * 8                       # per-tap channel block (8-aligned)

    wg = params["w_gates"].astype(jnp.float32)       # (4*Chid, Ctot, 3, 3), in = cat(x, hidden)
    # reorder input channels to [hidden, x] (matches the in-kernel staging buffer)
    wg = jnp.concatenate([wg[:, Cin:], wg[:, :Cin]], axis=1)
    wg = jnp.pad(wg, ((0, 0), (0, CB - Ctot), (0, 0), (0, 0)))        # pad channels to CB
    # column index = (ky*3 + kx)*CB + c  ->  (4*Chid, 9*CB)
    wg2d = jnp.transpose(wg, (0, 2, 3, 1)).reshape(4 * Chid, 9 * CB)
    bg = params["b_gates"].astype(jnp.float32).reshape(4 * Chid, 1)

    wo = params["w_out"].astype(jnp.float32)         # (Cin, Chid, 3, 3)
    wo2d = jnp.transpose(wo, (0, 2, 3, 1)).reshape(Cin, 9 * Chid)     # (Cin, 9*Chid)
    bo = params["b_out"].astype(jnp.float32).reshape(Cin, 1)

    return {"wg2d": wg2d, "bg": bg, "wo2d": wo2d, "bo": bo, "CB": CB}


# ----------------------------------------------------------------------------
# Kernel 2: normalize + gates conv + LSTM update + output conv (per batch elem)
# ----------------------------------------------------------------------------
def _convlstm_kernel(Cin, Chid, H, W, CB, PAD,
                     gn_ref, x_ref, h_ref, c_ref, wg_ref, bg_ref, wo_ref, bo_ref,
                     out_ref, hnew_ref, cnew_ref,
                     bpad_ref, hpad_ref, colsg_ref, colso_ref):
    HW = H * W
    WIDE = PAD + HW + PAD
    inv = 1.0 / gn_ref[0, 0]                          # scalar from SMEM

    # Horizontal-tap validity masks (row-boundary crossings), shape (1, HW).
    col = lax.broadcasted_iota(jnp.int32, (1, HW), 1) % W
    mask_l = (col >= 1).astype(jnp.float32)           # kx = -1
    mask_r = (col <= W - 2).astype(jnp.float32)       # kx = +1

    # ---- stage padded flat base = [hidden ; x/grad_norm ; zero-pad rows] ----
    # Zero pads each step (keeps the kernel correct under any grid->core
    # partitioning; cost is a handful of vector stores).
    # TODO(synk): a per-core once-only border init could shave ~30 KB of stores.
    bpad_ref[...] = jnp.zeros((CB, WIDE), jnp.float32)
    bpad_ref[pl.ds(0, Chid), pl.ds(PAD, HW)] = h_ref[0]
    bpad_ref[pl.ds(Chid, Cin), pl.ds(PAD, HW)] = x_ref[0] * inv
    bfull = bpad_ref[...]                             # (CB, WIDE) in registers

    # ---- im2col for the gates conv: tap k -> rows [k*CB, (k+1)*CB) ----------
    for k in range(9):
        ky, kx = k // 3 - 1, k % 3 - 1
        s = ky * W + kx                               # static flat shift
        blk = bfull[:, PAD + s:PAD + s + HW]          # (CB, HW), zero-extended in y
        if kx == -1:
            blk = blk * mask_l
        elif kx == 1:
            blk = blk * mask_r
        colsg_ref[pl.ds(k * CB, CB), :] = blk

    # ---- gates conv = ONE MXU matmul: (4*Chid, 9*CB) @ (9*CB, HW) -----------
    g = jnp.dot(wg_ref[...], colsg_ref[...],
                preferred_element_type=jnp.float32) + bg_ref[...]      # (4*Chid, HW)

    in_g = jax.nn.sigmoid(g[0 * Chid:1 * Chid])
    rem_g = jax.nn.sigmoid(g[1 * Chid:2 * Chid])
    out_g = jax.nn.sigmoid(g[2 * Chid:3 * Chid])
    cel_g = jnp.tanh(g[3 * Chid:4 * Chid])

    cell_new = rem_g * c_ref[0] + in_g * cel_g        # (Chid, HW)
    hidden_new = out_g * jnp.tanh(cell_new)

    cnew_ref[0] = cell_new.astype(cnew_ref.dtype)
    hnew_ref[0] = hidden_new.astype(hnew_ref.dtype)

    # ---- output conv on hidden_new: same im2col trick, ONE matmul -----------
    hpad_ref[...] = jnp.zeros((Chid, WIDE), jnp.float32)
    hpad_ref[:, pl.ds(PAD, HW)] = hidden_new
    hfull = hpad_ref[...]                             # (Chid, WIDE)
    for k in range(9):
        ky, kx = k // 3 - 1, k % 3 - 1
        s = ky * W + kx
        blk = hfull[:, PAD + s:PAD + s + HW]          # (Chid, HW)
        if kx == -1:
            blk = blk * mask_l
        elif kx == 1:
            blk = blk * mask_r
        colso_ref[pl.ds(k * Chid, Chid), :] = blk

    out = jnp.dot(wo_ref[...], colso_ref[...],
                  preferred_element_type=jnp.float32) + bo_ref[...]    # (Cin, HW)
    out_ref[0] = out.astype(out_ref.dtype)


# ----------------------------------------------------------------------------
# Wrapper: one recurrent step (no transposes / concat / pad on the host)
# ----------------------------------------------------------------------------
def convlstm_grad_forward(x_nchw, hidden_nchw, cell_nchw, packed, grad_norm=None):
    B, Cin, H, W = x_nchw.shape
    Chid = hidden_nchw.shape[1]
    HW = H * W
    CB = packed["CB"]
    PAD = 128                                         # lane-aligned interior offset

    if grad_norm is None:                             # mirrors `if self._grad_norm is None`
        grad_norm = _compute_grad_norm(x_nchw)        # (1, 1) f32

    # TODO(synk): nn.Dropout(0.1) is implemented as identity (eval mode);
    # train-mode stochastic dropout would use pltpu.prng_* inside the kernel.
    # downsamp=None -> AvgPool2d / UpsamplingBilinear2d are identities.

    # NCHW-flat views (free reshapes, no transposes).
    x = x_nchw.reshape(B, Cin, HW).astype(jnp.float32)
    hidden = hidden_nchw.reshape(B, Chid, HW).astype(jnp.float32)
    cell = cell_nchw.reshape(B, Chid, HW).astype(jnp.float32)

    kernel = functools.partial(_convlstm_kernel, Cin, Chid, H, W, CB, PAD)

    out, hid_new, cell_new = pl.pallas_call(
        kernel,
        grid=(B,),                                    # "parallel": 2 TCs on v7x split B
        in_specs=[
            pl.BlockSpec(memory_space=pltpu.MemorySpace.SMEM),        # grad_norm (1,1)
            pl.BlockSpec((1, Cin, HW), lambda b: (b, 0, 0)),          # x
            pl.BlockSpec((1, Chid, HW), lambda b: (b, 0, 0)),         # hidden
            pl.BlockSpec((1, Chid, HW), lambda b: (b, 0, 0)),         # cell
            pl.BlockSpec((4 * Chid, 9 * CB), lambda b: (0, 0)),       # wg2d (packed)
            pl.BlockSpec((4 * Chid, 1), lambda b: (0, 0)),            # bg
            pl.BlockSpec((Cin, 9 * Chid), lambda b: (0, 0)),          # wo2d (packed)
            pl.BlockSpec((Cin, 1), lambda b: (0, 0)),                 # bo
        ],
        out_specs=[
            pl.BlockSpec((1, Cin, HW), lambda b: (b, 0, 0)),          # out     (NCHW-flat)
            pl.BlockSpec((1, Chid, HW), lambda b: (b, 0, 0)),         # hidden'
            pl.BlockSpec((1, Chid, HW), lambda b: (b, 0, 0)),         # cell'
        ],
        out_shape=[
            jax.ShapeDtypeStruct((B, Cin, HW), jnp.float32),
            jax.ShapeDtypeStruct((B, Chid, HW), jnp.float32),
            jax.ShapeDtypeStruct((B, Chid, HW), jnp.float32),
        ],
        scratch_shapes=[
            pltpu.VMEM((CB, PAD + HW + PAD), jnp.float32),            # padded [hidden; x]
            pltpu.VMEM((Chid, PAD + HW + PAD), jnp.float32),          # padded hidden_new
            pltpu.VMEM((9 * CB, HW), jnp.float32),                    # gates im2col (K=9*CB)
            pltpu.VMEM((9 * Chid, HW), jnp.float32),                  # out-conv im2col
        ],
        compiler_params=pltpu.CompilerParams(dimension_semantics=("parallel",)),
    )(grad_norm, x, hidden, cell, packed["wg2d"], packed["bg"], packed["wo2d"], packed["bo"])

    out_nchw = out.reshape(B, Cin, H, W)
    hid_nchw = hid_new.reshape(B, Chid, H, W)
    cnew_nchw = cell_new.reshape(B, Chid, H, W)
    return out_nchw, (hid_nchw, cnew_nchw), grad_norm


# ----------------------------------------------------------------------------
# Pure-JAX reference (for correctness check)
# ----------------------------------------------------------------------------
def reference_forward(x, hidden, cell, params, grad_norm=None):
    if grad_norm is None:
        grad_norm = jnp.sqrt(jnp.mean(x ** 2))
    xn = x / grad_norm
    xh = jnp.concatenate([xn, hidden], axis=1)
    dn = ("NCHW", "OIHW", "NCHW")
    gates = lax.conv_general_dilated(xh, params["w_gates"], (1, 1), "SAME",
                                     dimension_numbers=dn)
    gates = gates + params["b_gates"][None, :, None, None]
    i_g, r_g, o_g, c_g = jnp.split(gates, 4, axis=1)
    i_g, r_g, o_g = jax.nn.sigmoid(i_g), jax.nn.sigmoid(r_g), jax.nn.sigmoid(o_g)
    c_g = jnp.tanh(c_g)
    cell_new = r_g * cell + i_g * c_g
    hidden_new = o_g * jnp.tanh(cell_new)
    out = lax.conv_general_dilated(hidden_new, params["w_out"], (1, 1), "SAME",
                                   dimension_numbers=dn)
    out = out + params["b_out"][None, :, None, None]
    return out, (hidden_new, cell_new), grad_norm


if __name__ == "__main__":
    B, Cin, Chid, H, W = 2, 4, 8, 16, 16

    key = jax.random.PRNGKey(0)
    k1, k2, k3, k4, k5, k6 = jax.random.split(key, 6)
    params = {
        "w_gates": 0.1 * jax.random.normal(k1, (4 * Chid, Cin + Chid, 3, 3), jnp.float32),
        "b_gates": 0.1 * jax.random.normal(k2, (4 * Chid,), jnp.float32),
        "w_out":   0.1 * jax.random.normal(k3, (Cin, Chid, 3, 3), jnp.float32),
        "b_out":   0.1 * jax.random.normal(k4, (Cin,), jnp.float32),
    }
    x1 = jax.random.normal(k5, (B, Cin, H, W), jnp.float32)
    x2 = jax.random.normal(k6, (B, Cin, H, W), jnp.float32)

    # reset_state(): zero hidden / cell (downsamp=None -> identity pooling)
    hidden0 = jnp.zeros((B, Chid, H, W), jnp.float32)
    cell0 = jnp.zeros((B, Chid, H, W), jnp.float32)

    # Weight repacking hoisted: done ONCE, not per recurrent step.
    packed = pack_params(params, Cin, Chid)

    # Two recurrent steps through the Pallas kernels (grad_norm cached after step 1).
    out1, (h1, c1), gn = convlstm_grad_forward(x1, hidden0, cell0, packed, grad_norm=None)
    out2, (h2, c2), _ = convlstm_grad_forward(x2, h1, c1, packed, grad_norm=gn)
    jax.block_until_ready((out1, out2, h2, c2))

    # Reference check.
    rout1, (rh1, rc1), rgn = reference_forward(x1, hidden0, cell0, params, grad_norm=None)
    rout2, (rh2, rc2), _ = reference_forward(x2, rh1, rc1, params, grad_norm=rgn)

    np.testing.assert_allclose(np.asarray(gn).reshape(()), np.asarray(rgn), rtol=1e-5, atol=1e-5)
    np.testing.assert_allclose(np.asarray(out1), np.asarray(rout1), rtol=2e-4, atol=2e-4)
    np.testing.assert_allclose(np.asarray(out2), np.asarray(rout2), rtol=2e-4, atol=2e-4)
    np.testing.assert_allclose(np.asarray(h2), np.asarray(rh2), rtol=2e-4, atol=2e-4)
    np.testing.assert_allclose(np.asarray(c2), np.asarray(rc2), rtol=2e-4, atol=2e-4)

    print("KERNEL_OK")
</pallas_src>

<mosaic_0001>
module attributes {stable_mosaic.version = 11 : i64} {
  func.func @_grad_norm_kernel(%arg0: memref<16x128xf32, #tpu.memory_space<vmem>>, %arg1: memref<1x1xf32, #tpu.memory_space<vmem>>) attributes {dimension_semantics = [], scalar_prefetch = 0 : i64, scratch_operands = 0 : i64, tpu.core_type = #tpu.core_type<tc>} {
    %c0 = arith.constant 0 : index
    %c0_0 = arith.constant 0 : index
    %0 = vector.load %arg0[%c0, %c0_0] : memref<16x128xf32, #tpu.memory_space<vmem>>, vector<16x128xf32>
    %1 = arith.mulf %0, %0 : vector<16x128xf32>
    %2 = vector.shape_cast %1 : vector<16x128xf32> to vector<1x16x128xf32>
    %cst = arith.constant dense<0.000000e+00> : vector<1xf32>
    %3 = vector.multi_reduction <add>, %2, %cst [1, 2] : vector<1x16x128xf32> to vector<1xf32>
    %4 = vector.shape_cast %3 : vector<1xf32> to vector<1x1x1xf32>
    %5 = vector.extract %4[0, 0, 0] : f32 from vector<1x1x1xf32>
    %6 = vector.broadcast %5 : f32 to vector<1x1xf32>
    %cst_1 = arith.constant 2.048000e+03 : f32
    %7 = vector.broadcast %cst_1 : f32 to vector<1x1xf32>
    %8 = arith.divf %6, %7 : vector<1x1xf32>
    %9 = math.sqrt %8 : vector<1x1xf32>
    %c0_2 = arith.constant 0 : index
    %c0_3 = arith.constant 0 : index
    %10 = vector.load %arg1[%c0_2, %c0_3] : memref<1x1xf32, #tpu.memory_space<vmem>>, vector<1x1xf32>
    tpu.vector_store %arg1[%c0_2, %c0_3], %9 {strides = array<i32>} : memref<1x1xf32, #tpu.memory_space<vmem>>, vector<1x1xf32>,
    return
  }
}

</mosaic_0001>

<llo_original>
// kernel: tpu_custom_call.1
$region0: #{tpu_custom_call.1}
  #allocation0 [shape = 'u32[]', space=smem, size = 0x4, offset = 0x4, fixed_abs, tag = 'smem constant byte address 0x4 - core index']
  #allocation1 [shape = 'u32[144,128]{1,0:T(1,128)}', space=vmem, size = 0x12000, scoped, tag = 'internal scratch']
  %s0 = inlined_call_operand.hbm [shape: f32[16,128], index: 0, kind: input, shape index: {}]
  %s1 = inlined_call_operand.hbm [shape: f32[1,1], index: 1, kind: output, shape index: {}]
  %s2 = sld [smem:[#allocation0]]
  $region18: #{tpu_custom_call.1} parent=0
    _
  %s4 = ssub.s32 1, %s2
  %s5 = scalar_select 0, %s4, %s2
  $region1: #{tpu_custom_call.1} parent=0
    #allocation2 [shape = 'u8[8192]{0}', space=vmem, size = 0x2000, scoped, tag = 'input window, operand 0, single buffered']
    #allocation3 [shape = 's32[1]{0}', space=sflag, size = 0x4, scoped, tag = 'scoped memory for tpu_custom_call.1']
    #allocation4 [shape = 's32[1]{0}', space=sflag, size = 0x4, scoped, tag = 'scoped memory for tpu_custom_call.1']
    #allocation5 [shape = 'u8[512]{0}', space=vmem, size = 0x400, scoped, tag = 'output window, operand 0, single buffered']
    %6 = vsyncpa [#allocation3], 0
    %7 = vsyncpa [#allocation4], 0
    // Predicated region
    $region2: #{tpu_custom_call.1} parent=1 // pred_check
      _
    $region3: #{tpu_custom_call.1} parent=1 // pred_check_branch
      %9 = sbr.rel (0) target = $region5
    $region4: #{tpu_custom_call.1} parent=1 // pred_region
      %s11 = ssub.s32 256, 256
      %12 = vsyncadd [#allocation3], %s11
      %s13 = sshll.u32 [#allocation2], 4
      %s14 = int_to_ptr.vmem [resolvable:$true] %s13
      %19 = dma.hbm_to_vmem [thread:$0]  %s0, 256, %s14, [#allocation3], 128, 128, 8
    $region5: #{tpu_custom_call.1} parent=1 // pred_fallthru
      _
    // Predicated region
    $region6: #{tpu_custom_call.1} parent=1 // pred_check
      _
    $region7: #{tpu_custom_call.1} parent=1 // pred_check_branch
      %21 = sbr.rel (0) target = $region9
    $region8: #{tpu_custom_call.1} parent=1 // pred_region
      %22 = dma.done [#allocation3], 256
    $region9: #{tpu_custom_call.1} parent=1 // pred_fallthru
      _
    %v23 = vld [vmem:[#allocation2] sm:$0xff]
    %v24 = vld [vmem:[#allocation2 + $0x8] sm:$0xff]
    %v25 = vmul.f32 %v23, %v23
    %v26 = vmul.f32 %v24, %v24
    %v27 = vadd.f32 %v25, %v26
    %28 = vadd.xlane.f32.xlu0 %v27
    %v29 = vpop.xlane.xlu0 %28
    %v30 = vrot.slane %v29, 4
    %v31 = vadd.f32 %v29, %v30
    %v32 = vrot.slane %v31, 2
    %v33 = vadd.f32 %v31, %v32
    %v34 = vrot.slane %v33, 1
    %v35 = vadd.f32 %v33, %v34
    %s36 = vtos %v35
    %v37 = vstv %s36
    %v38 = vrcp.pop 2048.0
    %v39 = vmul.f32 %v37, %v38
    %v40 = vrsqrt.pop %v39
    %v41 = vmul.f32 %v39, %v40
    %vm42 = vcmp.eq.f32.partialorder %v39, inf
    %v43 = vsel %vm42, %v39, %v41
    %vm44 = vcmp.eq.f32.partialorder %v39, 0.0
    %v45 = vand.u32 %v39, 2147483648
    %v46 = vsel %vm44, %v45, %v43
    %vm47 = vcmask 0
    %48 = vst.msk [vmem:[#allocation5] sm:$0x1] %vm47, %v46
    // Predicated region
    $region10: #{tpu_custom_call.1} parent=1 // pred_check
      _
    $region11: #{tpu_custom_call.1} parent=1 // pred_check_branch
      %50 = sbr.rel (0) target = $region13
    $region12: #{tpu_custom_call.1} parent=1 // pred_region
      %s52 = ssub.s32 16, 16
      %53 = vsyncadd [#allocation4], %s52
      %s55 = sshll.u32 [#allocation5], 4
      %s56 = int_to_ptr.vmem [resolvable:$true] %s55
      %58 = dma.vmem_to_hbm [thread:$0]  %s56, 16, %s1, [#allocation4]
    $region13: #{tpu_custom_call.1} parent=1 // pred_fallthru
      _
    // Predicated region
    $region14: #{tpu_custom_call.1} parent=1 // pred_check
      _
    $region15: #{tpu_custom_call.1} parent=1 // pred_check_branch
      %60 = sbr.rel (0) target = $region17
    $region16: #{tpu_custom_call.1} parent=1 // pred_region
      %61 = dma.done [#allocation4], 16
    $region17: #{tpu_custom_call.1} parent=1 // pred_fallthru
      _
    %62 = vsyncpa [#allocation3], 1
    %63 = vsyncpa [#allocation4], 1

</llo_original>
